<compile_context>
chip_gen: v7x
topology: tpu7x:2x2x1
jax: 0.10.0
libtpu: 0.0.40
codegen_flags: <defaults>
</compile_context>

<pallas_src>
import functools

import jax
import jax.numpy as jnp
from jax.experimental import pallas as pl
from jax.experimental.pallas import tpu as pltpu


def _round_up(x: int, m: int) -> int:
    return (x + m - 1) // m * m


def _gray_world_kernel(img_ref, out_ref, acc_ref, *, inv_n: float):
    """Tiled gray-world reduction.

    img_ref : (3, T) native-dtype VMEM tile (lane-dense flattened pixels)
    out_ref : (1, 1) f32 VMEM output (written in the epilogue only)
    acc_ref : (3, T) f32 VMEM scratch holding per-lane partial channel sums
    inv_n   : Python float 1 / (H * W)  (baked in as a literal, not a const)
    """
    step = pl.program_id(0)

    @pl.when(step == 0)
    def _init():
        acc_ref[...] = jnp.zeros_like(acc_ref)

    # Hot path: cast + per-lane accumulate -> pure VPU work, no XLU.
    acc_ref[...] += img_ref[...].astype(jnp.float32)

    @pl.when(step == pl.num_programs(0) - 1)
    def _epilogue():
        # One cross-lane reduce over the whole accumulator -> (3, 1).
        sums = jnp.sum(acc_ref[...], axis=1, keepdims=True)
        means = sums * inv_n                      # (3, 1), Python-float literal

        mean_r = means[0:1, :]
        mean_g = means[1:2, :]
        mean_b = means[2:3, :]
        mean_gray = (mean_r + mean_g + mean_b) / 3.0

        loss_r = (mean_r - mean_gray) ** 2
        loss_g = (mean_g - mean_gray) ** 2
        loss_b = (mean_b - mean_gray) ** 2

        # Matches the PyTorch expression `loss_r + loss_g + loss_b / 3` exactly.
        out_ref[...] = loss_r + loss_g + loss_b / 3.0


def gray_world_assumption_loss(
    image: jax.Array, *, max_block_lanes: int = 128 * 1024
) -> jax.Array:
    """image: (3, H, W) array (any float/int dtype) -> scalar float32 loss."""
    assert image.ndim == 3 and image.shape[0] == 3, "expected (3, H, W) CHW image"
    assert max_block_lanes % 128 == 0
    _, h, w = image.shape
    n = h * w

    # Lane-dense layout: (3, H*W). Keep the input in its NATIVE dtype; the
    # kernel casts to f32 while accumulating.
    flat = image.reshape(3, n)

    # Tile the flattened axis in multiples of 128 lanes, capped so a block
    # stays ~1.5 MiB (f32) and double-buffering + scratch fit scoped VMEM.
    if n <= max_block_lanes:
        tile = _round_up(n, 128)
    else:
        tile = max_block_lanes
    padded = _round_up(n, tile)
    if padded != n:
        # Zero padding does not change the channel sums; we divide by the
        # true pixel count below.
        flat = jnp.pad(flat, ((0, 0), (0, padded - n)))
    grid = (padded // tile,)

    kernel = functools.partial(_gray_world_kernel, inv_n=float(1.0 / n))

    out = pl.pallas_call(
        kernel,
        out_shape=jax.ShapeDtypeStruct((1, 1), jnp.float32),
        grid=grid,
        in_specs=[pl.BlockSpec((3, tile), lambda t: (0, t))],
        out_specs=pl.BlockSpec((1, 1), lambda t: (0, 0)),
        scratch_shapes=[pltpu.VMEM((3, tile), jnp.float32)],
        compiler_params=pltpu.CompilerParams(
            dimension_semantics=("arbitrary",),
        ),
    )(flat)
    return out[0, 0]


def _reference(image: jnp.ndarray) -> jnp.ndarray:
    # Pure-JAX reference, mirroring the PyTorch module line-for-line.
    mean_r = jnp.mean(image[0, :, :])
    mean_g = jnp.mean(image[1, :, :])
    mean_b = jnp.mean(image[2, :, :])
    mean_gray = (mean_r + mean_g + mean_b) / 3
    loss_r = jnp.mean((mean_r - mean_gray) ** 2)
    loss_g = jnp.mean((mean_g - mean_gray) ** 2)
    loss_b = jnp.mean((mean_b - mean_gray) ** 2)
    return loss_r + loss_g + loss_b / 3


if __name__ == "__main__":
    key = jax.random.PRNGKey(0)
    k1, k2 = jax.random.split(key)

    # Small CHW image consistent with the module's forward: (3, 16, 16).
    img_small = jax.random.uniform(k1, (3, 16, 16), dtype=jnp.float32)
    loss_small = gray_world_assumption_loss(img_small)
    jax.block_until_ready(loss_small)
    ref_small = _reference(img_small)
    assert jnp.allclose(loss_small, ref_small, rtol=1e-5, atol=1e-6), (
        loss_small,
        ref_small,
    )

    # Non-aligned spatial size with a tiny tile cap to exercise the
    # multi-step accumulation + zero-padding path (grid of 8 x 256-lane tiles).
    img_odd = jax.random.uniform(k2, (3, 40, 50), dtype=jnp.float32)
    loss_odd = gray_world_assumption_loss(img_odd, max_block_lanes=256)
    jax.block_until_ready(loss_odd)
    ref_odd = _reference(img_odd)
    assert jnp.allclose(loss_odd, ref_odd, rtol=1e-5, atol=1e-6), (loss_odd, ref_odd)

    print("KERNEL_OK")
</pallas_src>

<mosaic_0001>
module attributes {stable_mosaic.version = 11 : i64} {
  func.func @_gray_world_kernel(%arg0: i32, %arg1: memref<3x256xf32, #tpu.memory_space<vmem>>, %arg2: memref<1x1xf32, #tpu.memory_space<vmem>>, %arg3: memref<3x256xf32, #tpu.memory_space<vmem>>) attributes {dimension_semantics = [#tpu.dimension_semantics<arbitrary>], iteration_bounds = array<i64: 1>, scalar_prefetch = 0 : i64, scratch_operands = 1 : i64, tpu.core_type = #tpu.core_type<tc>, window_params = [{transform_indices = @transform_0, window_bounds = array<i64: 3, 256>}, {pipeline_mode = #tpu.pipeline_mode<synchronous>, transform_indices = @transform_1, window_bounds = array<i64: 1, 1>}]} {
    %c0_i32 = arith.constant 0 : i32
    %0 = arith.cmpi eq, %arg0, %c0_i32 : i32
    %1 = arith.extui %0 : i1 to i32
    %c0_i32_0 = arith.constant 0 : i32
    %2 = arith.cmpi ne, %1, %c0_i32_0 : i32
    scf.if %2 {
      %cst = arith.constant 0.000000e+00 : f32
      %10 = vector.broadcast %cst : f32 to vector<3x256xf32>
      %c0_8 = arith.constant 0 : index
      %c0_9 = arith.constant 0 : index
      %11 = vector.load %arg3[%c0_8, %c0_9] : memref<3x256xf32, #tpu.memory_space<vmem>>, vector<3x256xf32>
      tpu.vector_store %arg3[%c0_8, %c0_9], %10 {strides = array<i32>} : memref<3x256xf32, #tpu.memory_space<vmem>>, vector<3x256xf32>,
    } else {
    }
    %c0 = arith.constant 0 : index
    %c0_1 = arith.constant 0 : index
    %3 = vector.load %arg3[%c0, %c0_1] : memref<3x256xf32, #tpu.memory_space<vmem>>, vector<3x256xf32>
    %c0_2 = arith.constant 0 : index
    %c0_3 = arith.constant 0 : index
    %4 = vector.load %arg1[%c0_2, %c0_3] : memref<3x256xf32, #tpu.memory_space<vmem>>, vector<3x256xf32>
    %5 = arith.addf %3, %4 : vector<3x256xf32>
    %c0_4 = arith.constant 0 : index
    %c0_5 = arith.constant 0 : index
    %6 = vector.load %arg3[%c0_4, %c0_5] : memref<3x256xf32, #tpu.memory_space<vmem>>, vector<3x256xf32>
    tpu.vector_store %arg3[%c0_4, %c0_5], %5 {strides = array<i32>} : memref<3x256xf32, #tpu.memory_space<vmem>>, vector<3x256xf32>,
    %c0_i32_6 = arith.constant 0 : i32
    %7 = arith.cmpi eq, %arg0, %c0_i32_6 : i32
    %8 = arith.extui %7 : i1 to i32
    %c0_i32_7 = arith.constant 0 : i32
    %9 = arith.cmpi ne, %8, %c0_i32_7 : i32
    scf.if %9 {
      %c0_8 = arith.constant 0 : index
      %c0_9 = arith.constant 0 : index
      %10 = vector.load %arg3[%c0_8, %c0_9] : memref<3x256xf32, #tpu.memory_space<vmem>>, vector<3x256xf32>
      %cst = arith.constant dense<0.000000e+00> : vector<3xf32>
      %11 = vector.multi_reduction <add>, %10, %cst [1] : vector<3x256xf32> to vector<3xf32>
      %12 = vector.shape_cast %11 : vector<3xf32> to vector<3x1xf32>
      %cst_10 = arith.constant 3.906250e-03 : f32
      %13 = vector.broadcast %cst_10 : f32 to vector<3x1xf32>
      %14 = arith.mulf %12, %13 : vector<3x1xf32>
      %15 = vector.extract_strided_slice %14 {offsets = [0, 0], sizes = [1, 1], strides = [1, 1]} : vector<3x1xf32> to vector<1x1xf32>
      %16 = vector.extract_strided_slice %14 {offsets = [1, 0], sizes = [1, 1], strides = [1, 1]} : vector<3x1xf32> to vector<1x1xf32>
      %17 = vector.extract_strided_slice %14 {offsets = [2, 0], sizes = [1, 1], strides = [1, 1]} : vector<3x1xf32> to vector<1x1xf32>
      %18 = arith.addf %15, %16 : vector<1x1xf32>
      %19 = arith.addf %18, %17 : vector<1x1xf32>
      %cst_11 = arith.constant 3.000000e+00 : f32
      %20 = vector.broadcast %cst_11 : f32 to vector<1x1xf32>
      %21 = arith.divf %19, %20 : vector<1x1xf32>
      %22 = arith.subf %15, %21 : vector<1x1xf32>
      %23 = arith.mulf %22, %22 : vector<1x1xf32>
      %24 = arith.subf %16, %21 : vector<1x1xf32>
      %25 = arith.mulf %24, %24 : vector<1x1xf32>
      %26 = arith.subf %17, %21 : vector<1x1xf32>
      %27 = arith.mulf %26, %26 : vector<1x1xf32>
      %28 = arith.addf %23, %25 : vector<1x1xf32>
      %cst_12 = arith.constant 3.000000e+00 : f32
      %29 = vector.broadcast %cst_12 : f32 to vector<1x1xf32>
      %30 = arith.divf %27, %29 : vector<1x1xf32>
      %31 = arith.addf %28, %30 : vector<1x1xf32>
      %c0_13 = arith.constant 0 : index
      %c0_14 = arith.constant 0 : index
      %32 = vector.load %arg2[%c0_13, %c0_14] : memref<1x1xf32, #tpu.memory_space<vmem>>, vector<1x1xf32>
      tpu.vector_store %arg2[%c0_13, %c0_14], %31 {strides = array<i32>} : memref<1x1xf32, #tpu.memory_space<vmem>>, vector<1x1xf32>,
    } else {
    }
    return
  }
  func.func @transform_0(%arg0: i32) -> (i32, i32) {
    %c0_i32 = arith.constant 0 : i32
    %c0_i32_0 = arith.constant 0 : i32
    return %c0_i32, %arg0 : i32, i32
  }
  func.func @transform_1(%arg0: i32) -> (i32, i32) {
    %c0_i32 = arith.constant 0 : i32
    %c0_i32_0 = arith.constant 0 : i32
    %c0_i32_1 = arith.constant 0 : i32
    return %c0_i32, %c0_i32_0 : i32, i32
  }
}

</mosaic_0001>

<llo_original>
// kernel: tpu_custom_call.1
$region0: #{tpu_custom_call.1}
  #allocation0 [shape = 'u32[]', space=smem, size = 0x4, offset = 0x4, fixed_abs, tag = 'smem constant byte address 0x4 - core index']
  #allocation1 [shape = 'u32[144,128]{1,0:T(1,128)}', space=vmem, size = 0x12000, scoped, tag = 'internal scratch']
  #allocation2 [shape = 'f32[3,256]{1,0:T(4,128)}', space=vmem, size = 0x1000, scoped, tag = 'scratch operand']
  %s0 = inlined_call_operand.hbm [shape: f32[3,256], index: 0, kind: input, shape index: {}]
  %s1 = inlined_call_operand.hbm [shape: f32[1,1], index: 1, kind: output, shape index: {}]
  %s2 = sld [smem:[#allocation0]]
  $region26: #{tpu_custom_call.1} parent=0
    _
  %s4 = ssub.s32 1, %s2
  %s5 = scalar_select 0, %s4, %s2
  $region1: #{tpu_custom_call.1} parent=0
    #allocation3 [shape = 'u8[4096]{0}', space=vmem, size = 0x1000, scoped, tag = 'input window, operand 0, single buffered']
    #allocation4 [shape = 's32[1]{0}', space=sflag, size = 0x4, scoped, tag = 'scoped memory for tpu_custom_call.1']
    #allocation5 [shape = 's32[1]{0}', space=sflag, size = 0x4, scoped, tag = 'scoped memory for tpu_custom_call.1']
    #allocation6 [shape = 'u8[512]{0}', space=vmem, size = 0x400, scoped, tag = 'output window, operand 0, single buffered']
    %6 = vsyncpa [#allocation4], 0
    %7 = vsyncpa [#allocation5], 0
    // Predicated region
    $region2: #{tpu_custom_call.1} parent=1 // pred_check
      _
    $region3: #{tpu_custom_call.1} parent=1 // pred_check_branch
      %9 = sbr.rel (0) target = $region5
    $region4: #{tpu_custom_call.1} parent=1 // pred_region
      %s11 = ssub.s32 128, 128
      %12 = vsyncadd [#allocation4], %s11
      %s14 = sshll.u32 [#allocation3], 4
      %s15 = int_to_ptr.vmem [resolvable:$true] %s14
      %17 = dma.hbm_to_vmem [thread:$0]  %s0, 128, %s15, [#allocation4]
    $region5: #{tpu_custom_call.1} parent=1 // pred_fallthru
      _
    // Predicated region
    $region6: #{tpu_custom_call.1} parent=1 // pred_check
      _
    $region7: #{tpu_custom_call.1} parent=1 // pred_check_branch
      %19 = sbr.rel (0) target = $region9
    $region8: #{tpu_custom_call.1} parent=1 // pred_region
      %20 = dma.done [#allocation4], 128
    $region9: #{tpu_custom_call.1} parent=1 // pred_fallthru
      _
    %p21 = scmp.eq.s32.totalorder 0, 0
    // Predicated region
    $region10: #{tpu_custom_call.1} parent=1 // pred_check
      %p22 = pneg %p21
    $region11: #{tpu_custom_call.1} parent=1 // pred_check_branch
      %24 = sbr.rel (%p22) target = $region13
    $region12: #{tpu_custom_call.1} parent=1 // pred_region
      %25 = vst [vmem:[#allocation2] sm:$0x77] 0.0
    $region13: #{tpu_custom_call.1} parent=1 // pred_fallthru
      _
    %v26 = vld [vmem:[#allocation2] sm:$0x77]
    %v27 = vld [vmem:[#allocation3] sm:$0x77]
    %v28 = vadd.f32 %v26, %v27
    %29 = vst [vmem:[#allocation2] sm:$0x77] %v28
    // Predicated region
    $region14: #{tpu_custom_call.1} parent=1 // pred_check
      %p30 = pneg %p21
    $region15: #{tpu_custom_call.1} parent=1 // pred_check_branch
      %32 = sbr.rel (%p30) target = $region17
    $region16: #{tpu_custom_call.1} parent=1 // pred_region
      %v33 = vld [vmem:[#allocation2] sm:$0x77]
      %v35 = vcombine.high %v33, %v33
      %vm37 = vcmask 1042432
      %v38 = vsel %vm37, %v33, 0.0
      %v39 = vsel %vm37, %v35, 0.0
      %v40 = vadd.f32 %v38, %v39
      %41 = vadd.xlane.f32.xlu0 %v40
      %v42 = vpop.xlane.xlu0 %41
      %v43 = vmul.f32 %v42, 0.00390625
      %v45 = vrot.slane %v43, 1
      %v47 = vadd.f32 %v43, %v45
      %v48 = vrot.slane %v43, 2
      %v50 = vadd.f32 %v47, %v48
      %v51 = vrcp.pop 3.0
      %v52 = vmul.f32 %v50, %v51
      %v53 = vsub.f32 %v43, %v52
      %v54 = vmul.f32 %v53, %v53
      %v56 = vrot.slane %v52, 7
      %v58 = vsub.f32 %v43, %v56
      %v59 = vmul.f32 %v58, %v58
      %v60 = vrot.slane %v52, 6
      %v62 = vsub.f32 %v43, %v60
      %v63 = vmul.f32 %v62, %v62
      %v65 = vrot.slane %v59, 1
      %v67 = vadd.f32 %v54, %v65
      %v68 = vmul.f32 %v63, %v51
      %v70 = vrot.slane %v68, 2
      %v72 = vadd.f32 %v67, %v70
      %vm73 = vcmask 0
      %74 = vst.msk [vmem:[#allocation6] sm:$0x1] %vm73, %v72
    $region17: #{tpu_custom_call.1} parent=1 // pred_fallthru
      _
    // Predicated region
    $region18: #{tpu_custom_call.1} parent=1 // pred_check
      _
    $region19: #{tpu_custom_call.1} parent=1 // pred_check_branch
      %76 = sbr.rel (0) target = $region21
    $region20: #{tpu_custom_call.1} parent=1 // pred_region
      %s78 = ssub.s32 16, 16
      %79 = vsyncadd [#allocation5], %s78
      %s81 = sshll.u32 [#allocation6], 4
      %s82 = int_to_ptr.vmem [resolvable:$true] %s81
      %84 = dma.vmem_to_hbm [thread:$0]  %s82, 16, %s1, [#allocation5]
    $region21: #{tpu_custom_call.1} parent=1 // pred_fallthru
      _
    // Predicated region
    $region22: #{tpu_custom_call.1} parent=1 // pred_check
      _
    $region23: #{tpu_custom_call.1} parent=1 // pred_check_branch
      %86 = sbr.rel (0) target = $region25
    $region24: #{tpu_custom_call.1} parent=1 // pred_region
      %87 = dma.done [#allocation5], 16
    $region25: #{tpu_custom_call.1} parent=1 // pred_fallthru
      _
    %88 = vsyncpa [#allocation4], 1
    %89 = vsyncpa [#allocation5], 1

</llo_original>
